<compile_context>
chip_gen: v5e
topology: v5e:2x2
jax: 0.10.0
libtpu: 0.0.40
codegen_flags: <defaults>
</compile_context>

<pallas_src>
import functools
from typing import Any, NamedTuple

import jax
import jax.numpy as jnp
from jax.experimental import pallas as pl
from jax.experimental.pallas import tpu as pltpu


# --------------------------------------------------------------------------- kernels
def _noisy_linear_kernel(x_ref, xn_ref, wmu_ref, wsig_ref, eout_ref, b_ref,
                         o_ref, acc_mu, acc_sig):
    """Training step per (i, j, k) grid tile:
         x (tm,tk), x*eps_in (tm,tk), mu^T (tk,tn), sigma^T (tk,tn),
         eps_out (1,tn), bias (1,tn), out (tm,tn).
       y = x @ mu^T + ((x*eps_in) @ sigma^T) * eps_out + bias  -- the dense
       weight_epsilon is never materialized.  Two f32 accumulators keep the two MXU
       results from being simultaneously live; the eps_out scale + bias happen once
       in the finalize, not per K step."""
    k = pl.program_id(2)

    @pl.when(k == 0)
    def _():
        acc_mu[...] = jnp.zeros_like(acc_mu)
        acc_sig[...] = jnp.zeros_like(acc_sig)

    acc_mu[...] += jnp.dot(x_ref[...], wmu_ref[...],
                           preferred_element_type=jnp.float32)
    acc_sig[...] += jnp.dot(xn_ref[...], wsig_ref[...],
                            preferred_element_type=jnp.float32)

    @pl.when(k == pl.num_programs(2) - 1)
    def _():
        o_ref[...] = (acc_mu[...] + acc_sig[...] * eout_ref[...]
                      + b_ref[...]).astype(o_ref.dtype)


def _plain_linear_kernel(x_ref, w_ref, b_ref, o_ref, acc):
    """Eval / frozen-noise branch: y = x @ W^T + b, one streamed weight tensor."""
    k = pl.program_id(2)

    @pl.when(k == 0)
    def _():
        acc[...] = jnp.zeros_like(acc)

    acc[...] += jnp.dot(x_ref[...], w_ref[...],
                        preferred_element_type=jnp.float32)

    @pl.when(k == pl.num_programs(2) - 1)
    def _():
        o_ref[...] = (acc[...] + b_ref[...]).astype(o_ref.dtype)


# ----------------------------------------------------------------------- pack / meta
def _round_up(v, m):
    return ((v + m - 1) // m) * m


def _pad2d(a, rows, cols):
    pr, pc = rows - a.shape[0], cols - a.shape[1]
    if pr or pc:
        a = jnp.pad(a, ((0, pr), (0, pc)))
    return a


class NoisyLinearMeta(NamedTuple):
    in_f: int
    out_f: int
    Kp: int
    Np: int
    tk: int
    tn: int
    compute_dtype: Any


def pack_noisy_linear(params, eps_in, eps_out, *, block_n=512, block_k=1024,
                      compute_dtype=jnp.float32):
    """One-time (per parameter update / noise refresh) packing into the persistent
    kernel layout: weights pre-transposed to [in, out], padded to (Kp, Np), cast to
    the compute dtype.  The per-forward wrapper then touches only activation-sized
    data -- no weight-sized transpose/pad per call."""
    wmu, wsig = params["weight_mu"], params["weight_sigma"]
    bmu, bsig = params["bias_mu"], params["bias_sigma"]
    out_f, in_f = wmu.shape

    tn = min(block_n, _round_up(out_f, 128))
    tk = min(block_k, _round_up(in_f, 128))
    Np, Kp = _round_up(out_f, tn), _round_up(in_f, tk)

    packed = dict(
        wmu_t=_pad2d(wmu.T, Kp, Np).astype(compute_dtype),
        wsig_t=_pad2d(wsig.T, Kp, Np).astype(compute_dtype),
        bias_train=_pad2d((bmu + bsig * eps_out).reshape(1, out_f), 1, Np)
                   .astype(jnp.float32),
        bias_eval=_pad2d(bmu.reshape(1, out_f), 1, Np).astype(jnp.float32),
        eps_out_row=_pad2d(eps_out.reshape(1, out_f), 1, Np).astype(jnp.float32),
        eps_in=eps_in.astype(jnp.float32),                       # (in_f,), for x*eps_in
        eps_in_col=_pad2d(eps_in.reshape(in_f, 1), Kp, 1).astype(jnp.float32),
    )
    meta = NoisyLinearMeta(in_f=in_f, out_f=out_f, Kp=Kp, Np=Np, tk=tk, tn=tn,
                           compute_dtype=jnp.dtype(compute_dtype))
    return packed, meta


def fold_frozen_noise(packed):
    """Frozen-noise deployment (e.g. target network): fold
    W = mu + sigma * outer(eps_out, eps_in) once per reset_noise so every subsequent
    forward streams a single weight-sized tensor through the plain-linear kernel."""
    w = (packed["wmu_t"].astype(jnp.float32)
         + packed["wsig_t"].astype(jnp.float32)
         * packed["eps_in_col"] * packed["eps_out_row"]).astype(packed["wmu_t"].dtype)
    out = dict(packed)
    out["w_frozen_t"] = w
    return out


# --------------------------------------------------------------------------- forward
def noisy_linear_pallas(x, packed, *, meta, mode="train", block_m=256):
    """Forward pass of NoisyLinear.

    mode="train"  : y = x @ mu^T + ((x*eps_in) @ sigma^T) * eps_out + (bmu + bsig*eps_out)
    mode="eval"   : y = x @ mu^T + bmu
    mode="frozen" : plain linear with the folded noisy weight (call fold_frozen_noise)
    """
    B, in_f = x.shape
    assert in_f == meta.in_f, "x feature dim mismatch with packed params"
    cd = meta.compute_dtype
    min_sub = 16 if jnp.dtype(cd) == jnp.dtype(jnp.bfloat16) else 8

    tn, tk, Np, Kp = meta.tn, meta.tk, meta.Np, meta.Kp
    tm = min(block_m, _round_up(B, min_sub))
    Mp = _round_up(B, tm)

    # Megacore (v7x has 2 TensorCores): if both parallel axes would have a single
    # block, split N (or M) so both cores get work.  No effect on single-TC v5e/v6e.
    if Mp // tm == 1 and Np // tn == 1:
        if tn >= 256 and (tn // 2) % 128 == 0:
            tn //= 2
        elif tm >= 2 * min_sub and tm % (2 * min_sub) == 0:
            tm //= 2
    grid = (Mp // tm, Np // tn, Kp // tk)

    x_p = _pad2d(x, Mp, Kp).astype(cd)

    # Scoped-VMEM budget sized to the actual double-buffered working set; defaults
    # stay well under v7x's 64 MiB while allowing larger-than-default tiles.
    bpe = jnp.dtype(cd).itemsize
    train = (mode == "train")
    io_bytes = ((2 if train else 1) * tm * tk * bpe        # activations
                + (2 if train else 1) * tk * tn * bpe      # weights
                + (2 if train else 1) * tn * 4             # eps_out / bias rows
                + tm * tn * x.dtype.itemsize)              # output
    vmem_limit = int(min(max(2 * io_bytes + 2 * tm * tn * 4 + (8 << 20), 32 << 20),
                         48 << 20))
    cparams = pltpu.CompilerParams(
        dimension_semantics=("parallel", "parallel", "arbitrary"),
        vmem_limit_bytes=vmem_limit)

    if train:
        # x*eps_in is activation-sized; computing it here removes a (tm,tk) VPU
        # multiply and a per-k eps_in DMA from the kernel inner loop.
        xn_p = _pad2d(x * packed["eps_in"][None, :], Mp, Kp).astype(cd)
        out = pl.pallas_call(
            _noisy_linear_kernel,
            out_shape=jax.ShapeDtypeStruct((Mp, Np), x.dtype),
            grid_spec=pltpu.PrefetchScalarGridSpec(
                num_scalar_prefetch=0,
                grid=grid,
                in_specs=[
                    pl.BlockSpec((tm, tk), lambda i, j, k: (i, k)),   # x
                    pl.BlockSpec((tm, tk), lambda i, j, k: (i, k)),   # x * eps_in
                    pl.BlockSpec((tk, tn), lambda i, j, k: (k, j)),   # mu^T
                    pl.BlockSpec((tk, tn), lambda i, j, k: (k, j)),   # sigma^T
                    pl.BlockSpec((1, tn), lambda i, j, k: (0, j)),    # eps_out
                    pl.BlockSpec((1, tn), lambda i, j, k: (0, j)),    # bias
                ],
                out_specs=pl.BlockSpec((tm, tn), lambda i, j, k: (i, j)),
                scratch_shapes=[pltpu.VMEM((tm, tn), jnp.float32),
                                pltpu.VMEM((tm, tn), jnp.float32)],
            ),
            compiler_params=cparams,
        )(x_p, xn_p, packed["wmu_t"], packed["wsig_t"],
          packed["eps_out_row"], packed["bias_train"])
    else:
        if mode == "eval":
            w, b = packed["wmu_t"], packed["bias_eval"]
        elif mode == "frozen":
            w, b = packed["w_frozen_t"], packed["bias_train"]
        else:
            raise ValueError(f"unknown mode: {mode!r}")
        out = pl.pallas_call(
            _plain_linear_kernel,
            out_shape=jax.ShapeDtypeStruct((Mp, Np), x.dtype),
            grid_spec=pltpu.PrefetchScalarGridSpec(
                num_scalar_prefetch=0,
                grid=grid,
                in_specs=[
                    pl.BlockSpec((tm, tk), lambda i, j, k: (i, k)),   # x
                    pl.BlockSpec((tk, tn), lambda i, j, k: (k, j)),   # W^T
                    pl.BlockSpec((1, tn), lambda i, j, k: (0, j)),    # bias
                ],
                out_specs=pl.BlockSpec((tm, tn), lambda i, j, k: (i, j)),
                scratch_shapes=[pltpu.VMEM((tm, tn), jnp.float32)],
            ),
            compiler_params=cparams,
        )(x_p, w, b)

    return out[:B, :meta.out_f]


# -------------------------------------------------------------------- params / noise
def _scale_noise(key, size):
    """torch: x = randn(size); return x.sign() * x.abs().sqrt()"""
    x = jax.random.normal(key, (size,), dtype=jnp.float32)
    return jnp.sign(x) * jnp.sqrt(jnp.abs(x))


def reset_noise(key, in_features, out_features):
    """Factorized Gaussian noise (torch reset_noise).  weight_epsilon ==
    outer(eps_out, eps_in); bias_epsilon == eps_out."""
    k_in, k_out = jax.random.split(key)
    return _scale_noise(k_in, in_features), _scale_noise(k_out, out_features)


def init_noisy_linear(key, in_features, out_features, std_init=0.5):
    """Deterministic replica of NoisyLinear.__init__ / reset_parameters."""
    k_wmu, k_bmu = jax.random.split(key)
    mu_range = 1.0 / jnp.sqrt(jnp.float32(in_features))
    return dict(
        weight_mu=jax.random.uniform(k_wmu, (out_features, in_features),
                                     jnp.float32, -mu_range, mu_range),
        weight_sigma=jnp.full((out_features, in_features),
                              std_init / jnp.sqrt(jnp.float32(in_features)),
                              jnp.float32),
        bias_mu=jax.random.uniform(k_bmu, (out_features,),
                                   jnp.float32, -mu_range, mu_range),
        bias_sigma=jnp.full((out_features,),
                            std_init / jnp.sqrt(jnp.float32(out_features)),
                            jnp.float32),
    )


def _reference(x, p, eps_in, eps_out, training):
    if training:
        w = p["weight_mu"] + p["weight_sigma"] * jnp.outer(eps_out, eps_in)
        b = p["bias_mu"] + p["bias_sigma"] * eps_out
    else:
        w, b = p["weight_mu"], p["bias_mu"]
    return x @ w.T + b


# ------------------------------------------------------------------------------ main
if __name__ == "__main__":
    key = jax.random.PRNGKey(0)
    keys = jax.random.split(key, 9)

    # ---- case 1: toy RL head (B=8, in=32, out=64), f32 ---------------------------
    in_f, out_f, batch = 32, 64, 8
    params = init_noisy_linear(keys[0], in_f, out_f)
    eps_in, eps_out = reset_noise(keys[1], in_f, out_f)
    x = jax.random.normal(keys[2], (batch, in_f), dtype=jnp.float32)

    packed, meta = pack_noisy_linear(params, eps_in, eps_out)
    fwd_train = jax.jit(functools.partial(noisy_linear_pallas, meta=meta, mode="train"))
    y = jax.block_until_ready(fwd_train(x, packed))
    y_ref = _reference(x, params, eps_in, eps_out, training=True)
    assert y.shape == (batch, out_f)
    assert jnp.allclose(y, y_ref, atol=1e-4, rtol=1e-4), "train mismatch (case 1)"

    fwd_eval = jax.jit(functools.partial(noisy_linear_pallas, meta=meta, mode="eval"))
    y_e = jax.block_until_ready(fwd_eval(x, packed))
    y_e_ref = _reference(x, params, eps_in, eps_out, training=False)
    assert jnp.allclose(y_e, y_e_ref, atol=1e-4, rtol=1e-4), "eval mismatch (case 1)"

    packed_fr = fold_frozen_noise(packed)
    fwd_frozen = jax.jit(functools.partial(noisy_linear_pallas, meta=meta, mode="frozen"))
    y_f = jax.block_until_ready(fwd_frozen(x, packed_fr))
    assert jnp.allclose(y_f, y_ref, atol=1e-4, rtol=1e-4), "frozen mismatch (case 1)"

    # ---- case 2: unaligned shapes + multi-tile grid (padding, K reduction,
    # accumulator init/finalize) ----------------------------------------------------
    in2, out2, b2 = 200, 300, 36
    params2 = init_noisy_linear(keys[3], in2, out2)
    eps_in2, eps_out2 = reset_noise(keys[4], in2, out2)
    x2 = jax.random.normal(keys[5], (b2, in2), dtype=jnp.float32)

    packed2, meta2 = pack_noisy_linear(params2, eps_in2, eps_out2,
                                       block_n=128, block_k=128)
    fwd2 = jax.jit(functools.partial(noisy_linear_pallas, meta=meta2, mode="train"))
    y2 = jax.block_until_ready(fwd2(x2, packed2))
    y2_ref = _reference(x2, params2, eps_in2, eps_out2, training=True)
    assert y2.shape == (b2, out2)
    assert jnp.allclose(y2, y2_ref, atol=1e-4, rtol=1e-4), "train mismatch (case 2)"

    # ---- case 3: bf16 compute path (halved weight HBM traffic, f32 accumulate);
    # also exercises the v7x >=2-parallel-block split (Np=256 -> tn=128) ------------
    in3, out3, b3 = 256, 256, 24
    params3 = init_noisy_linear(keys[6], in3, out3)
    eps_in3, eps_out3 = reset_noise(keys[7], in3, out3)
    x3 = jax.random.normal(keys[8], (b3, in3), dtype=jnp.float32)

    packed3, meta3 = pack_noisy_linear(params3, eps_in3, eps_out3,
                                       compute_dtype=jnp.bfloat16)
    fwd3 = jax.jit(functools.partial(noisy_linear_pallas, meta=meta3, mode="train"))
    y3 = jax.block_until_ready(fwd3(x3, packed3))
    y3_ref = _reference(x3, params3, eps_in3, eps_out3, training=True)
    assert y3.shape == (b3, out3)
    assert jnp.allclose(y3, y3_ref, atol=3e-2, rtol=3e-2), "bf16 train mismatch (case 3)"

    print("KERNEL_OK")
</pallas_src>

<mosaic_0001>
module attributes {stable_mosaic.version = 11 : i64} {
  func.func @_noisy_linear_kernel(%arg0: i32, %arg1: i32, %arg2: i32, %arg3: memref<8x128xf32, #tpu.memory_space<vmem>>, %arg4: memref<8x128xf32, #tpu.memory_space<vmem>>, %arg5: memref<128x128xf32, #tpu.memory_space<vmem>>, %arg6: memref<128x128xf32, #tpu.memory_space<vmem>>, %arg7: memref<1x128xf32, #tpu.memory_space<vmem>>, %arg8: memref<1x128xf32, #tpu.memory_space<vmem>>, %arg9: memref<8x128xf32, #tpu.memory_space<vmem>>, %arg10: memref<8x128xf32, #tpu.memory_space<vmem>>, %arg11: memref<8x128xf32, #tpu.memory_space<vmem>>) attributes {dimension_semantics = [#tpu.dimension_semantics<parallel>, #tpu.dimension_semantics<parallel>, #tpu.dimension_semantics<arbitrary>], iteration_bounds = array<i64: 1, 1, 1>, scalar_prefetch = 0 : i64, scratch_operands = 2 : i64, tpu.core_type = #tpu.core_type<tc>, window_params = [{transform_indices = @transform_0, window_bounds = array<i64: 8, 128>}, {transform_indices = @transform_1, window_bounds = array<i64: 8, 128>}, {transform_indices = @transform_2, window_bounds = array<i64: 128, 128>}, {transform_indices = @transform_3, window_bounds = array<i64: 128, 128>}, {transform_indices = @transform_4, window_bounds = array<i64: 1, 128>}, {transform_indices = @transform_5, window_bounds = array<i64: 1, 128>}, {transform_indices = @transform_6, window_bounds = array<i64: 8, 128>}]} {
    %c0_i32 = arith.constant 0 : i32
    %0 = arith.cmpi eq, %arg2, %c0_i32 : i32
    %1 = arith.extui %0 : i1 to i32
    %c0_i32_0 = arith.constant 0 : i32
    %2 = arith.cmpi ne, %1, %c0_i32_0 : i32
    scf.if %2 {
      %cst_19 = arith.constant 0.000000e+00 : f32
      %18 = vector.broadcast %cst_19 : f32 to vector<8x128xf32>
      %c0_20 = arith.constant 0 : index
      %c0_21 = arith.constant 0 : index
      %19 = vector.load %arg10[%c0_20, %c0_21] : memref<8x128xf32, #tpu.memory_space<vmem>>, vector<8x128xf32>
      tpu.vector_store %arg10[%c0_20, %c0_21], %18 {strides = array<i32>} : memref<8x128xf32, #tpu.memory_space<vmem>>, vector<8x128xf32>,
      %cst_22 = arith.constant 0.000000e+00 : f32
      %20 = vector.broadcast %cst_22 : f32 to vector<8x128xf32>
      %c0_23 = arith.constant 0 : index
      %c0_24 = arith.constant 0 : index
      %21 = vector.load %arg11[%c0_23, %c0_24] : memref<8x128xf32, #tpu.memory_space<vmem>>, vector<8x128xf32>
      tpu.vector_store %arg11[%c0_23, %c0_24], %20 {strides = array<i32>} : memref<8x128xf32, #tpu.memory_space<vmem>>, vector<8x128xf32>,
    } else {
    }
    %c0 = arith.constant 0 : index
    %c0_1 = arith.constant 0 : index
    %3 = vector.load %arg10[%c0, %c0_1] : memref<8x128xf32, #tpu.memory_space<vmem>>, vector<8x128xf32>
    %c0_2 = arith.constant 0 : index
    %c0_3 = arith.constant 0 : index
    %4 = vector.load %arg3[%c0_2, %c0_3] : memref<8x128xf32, #tpu.memory_space<vmem>>, vector<8x128xf32>
    %c0_4 = arith.constant 0 : index
    %c0_5 = arith.constant 0 : index
    %5 = vector.load %arg5[%c0_4, %c0_5] : memref<128x128xf32, #tpu.memory_space<vmem>>, vector<128x128xf32>
    %cst = arith.constant dense<0.000000e+00> : vector<8x128xf32>
    %6 = tpu.matmul %4, %5, %cst {dimension_numbers = #tpu.dot_dimension_numbers<[1], [0], [0], [1], [0, 0, 1, 1], [], []>} : vector<8x128xf32>, vector<128x128xf32>, vector<8x128xf32> -> vector<8x128xf32>
    %7 = arith.addf %3, %6 : vector<8x128xf32>
    %c0_6 = arith.constant 0 : index
    %c0_7 = arith.constant 0 : index
    %8 = vector.load %arg10[%c0_6, %c0_7] : memref<8x128xf32, #tpu.memory_space<vmem>>, vector<8x128xf32>
    tpu.vector_store %arg10[%c0_6, %c0_7], %7 {strides = array<i32>} : memref<8x128xf32, #tpu.memory_space<vmem>>, vector<8x128xf32>,
    %c0_8 = arith.constant 0 : index
    %c0_9 = arith.constant 0 : index
    %9 = vector.load %arg11[%c0_8, %c0_9] : memref<8x128xf32, #tpu.memory_space<vmem>>, vector<8x128xf32>
    %c0_10 = arith.constant 0 : index
    %c0_11 = arith.constant 0 : index
    %10 = vector.load %arg4[%c0_10, %c0_11] : memref<8x128xf32, #tpu.memory_space<vmem>>, vector<8x128xf32>
    %c0_12 = arith.constant 0 : index
    %c0_13 = arith.constant 0 : index
    %11 = vector.load %arg6[%c0_12, %c0_13] : memref<128x128xf32, #tpu.memory_space<vmem>>, vector<128x128xf32>
    %cst_14 = arith.constant dense<0.000000e+00> : vector<8x128xf32>
    %12 = tpu.matmul %10, %11, %cst_14 {dimension_numbers = #tpu.dot_dimension_numbers<[1], [0], [0], [1], [0, 0, 1, 1], [], []>} : vector<8x128xf32>, vector<128x128xf32>, vector<8x128xf32> -> vector<8x128xf32>
    %13 = arith.addf %9, %12 : vector<8x128xf32>
    %c0_15 = arith.constant 0 : index
    %c0_16 = arith.constant 0 : index
    %14 = vector.load %arg11[%c0_15, %c0_16] : memref<8x128xf32, #tpu.memory_space<vmem>>, vector<8x128xf32>
    tpu.vector_store %arg11[%c0_15, %c0_16], %13 {strides = array<i32>} : memref<8x128xf32, #tpu.memory_space<vmem>>, vector<8x128xf32>,
    %c0_i32_17 = arith.constant 0 : i32
    %15 = arith.cmpi eq, %arg2, %c0_i32_17 : i32
    %16 = arith.extui %15 : i1 to i32
    %c0_i32_18 = arith.constant 0 : i32
    %17 = arith.cmpi ne, %16, %c0_i32_18 : i32
    scf.if %17 {
      %c0_19 = arith.constant 0 : index
      %c0_20 = arith.constant 0 : index
      %18 = vector.load %arg10[%c0_19, %c0_20] : memref<8x128xf32, #tpu.memory_space<vmem>>, vector<8x128xf32>
      %c0_21 = arith.constant 0 : index
      %c0_22 = arith.constant 0 : index
      %19 = vector.load %arg11[%c0_21, %c0_22] : memref<8x128xf32, #tpu.memory_space<vmem>>, vector<8x128xf32>
      %c0_23 = arith.constant 0 : index
      %c0_24 = arith.constant 0 : index
      %20 = vector.load %arg7[%c0_23, %c0_24] : memref<1x128xf32, #tpu.memory_space<vmem>>, vector<1x128xf32>
      %21 = vector.broadcast %20 : vector<1x128xf32> to vector<8x128xf32>
      %22 = arith.mulf %19, %21 : vector<8x128xf32>
      %23 = arith.addf %18, %22 : vector<8x128xf32>
      %c0_25 = arith.constant 0 : index
      %c0_26 = arith.constant 0 : index
      %24 = vector.load %arg8[%c0_25, %c0_26] : memref<1x128xf32, #tpu.memory_space<vmem>>, vector<1x128xf32>
      %25 = vector.broadcast %24 : vector<1x128xf32> to vector<8x128xf32>
      %26 = arith.addf %23, %25 : vector<8x128xf32>
      %c0_27 = arith.constant 0 : index
      %c0_28 = arith.constant 0 : index
      %27 = vector.load %arg9[%c0_27, %c0_28] : memref<8x128xf32, #tpu.memory_space<vmem>>, vector<8x128xf32>
      tpu.vector_store %arg9[%c0_27, %c0_28], %26 {strides = array<i32>} : memref<8x128xf32, #tpu.memory_space<vmem>>, vector<8x128xf32>,
    } else {
    }
    return
  }
  func.func @transform_0(%arg0: i32, %arg1: i32, %arg2: i32) -> (i32, i32) {
    %c0_i32 = arith.constant 0 : i32
    return %arg0, %arg2 : i32, i32
  }
  func.func @transform_1(%arg0: i32, %arg1: i32, %arg2: i32) -> (i32, i32) {
    %c0_i32 = arith.constant 0 : i32
    return %arg0, %arg2 : i32, i32
  }
  func.func @transform_2(%arg0: i32, %arg1: i32, %arg2: i32) -> (i32, i32) {
    %c0_i32 = arith.constant 0 : i32
    return %arg2, %arg1 : i32, i32
  }
  func.func @transform_3(%arg0: i32, %arg1: i32, %arg2: i32) -> (i32, i32) {
    %c0_i32 = arith.constant 0 : i32
    return %arg2, %arg1 : i32, i32
  }
  func.func @transform_4(%arg0: i32, %arg1: i32, %arg2: i32) -> (i32, i32) {
    %c0_i32 = arith.constant 0 : i32
    %c0_i32_0 = arith.constant 0 : i32
    return %c0_i32, %arg1 : i32, i32
  }
  func.func @transform_5(%arg0: i32, %arg1: i32, %arg2: i32) -> (i32, i32) {
    %c0_i32 = arith.constant 0 : i32
    %c0_i32_0 = arith.constant 0 : i32
    return %c0_i32, %arg1 : i32, i32
  }
  func.func @transform_6(%arg0: i32, %arg1: i32, %arg2: i32) -> (i32, i32) {
    %c0_i32 = arith.constant 0 : i32
    return %arg0, %arg1 : i32, i32
  }
}

</mosaic_0001>

<llo_original>
// kernel: noisy_linear_pallas.1
$region0: #{noisy_linear_pallas.1}
  #allocation0 [shape = 'u32[]', space=smem, size = 0x4, offset = 0x4, fixed_abs, tag = 'smem constant byte address 0x4 - core index']
  #allocation1 [shape = 'u32[72,128]{1,0:T(1,128)}', space=vmem, size = 0x9000, scoped, tag = 'internal scratch']
  #allocation2 [shape = 'f32[8,128]{1,0:T(8,128)}', space=vmem, size = 0x1000, scoped, tag = 'scratch operand']
  #allocation3 [shape = 'f32[8,128]{1,0:T(8,128)}', space=vmem, size = 0x1000, scoped, tag = 'scratch operand']
  %s0 = inlined_call_operand.vmem [shape: f32[8,128], index: 0, kind: input, shape index: {}]
  %s1 = inlined_call_operand.vmem [shape: f32[8,128], index: 1, kind: input, shape index: {}]
  %s2 = inlined_call_operand.hbm [shape: f32[128,128], index: 2, kind: input, shape index: {}]
  %s3 = inlined_call_operand.hbm [shape: f32[128,128], index: 3, kind: input, shape index: {}]
  %s4 = inlined_call_operand.vmem [shape: f32[1,128], index: 4, kind: input, shape index: {}]
  %s5 = inlined_call_operand.vmem [shape: f32[1,128], index: 5, kind: input, shape index: {}]
  %s6 = inlined_call_operand.hbm [shape: f32[8,128], index: 6, kind: output, shape index: {}]
  %s7 = sld [smem:[#allocation0]]
  $region50: #{noisy_linear_pallas.1} parent=0
    _
  %s9 = ssub.s32 1, %s7
  %s10 = scalar_select 0, %s9, %s7
  $region1: #{noisy_linear_pallas.1} parent=0
    #allocation4 [shape = 'u8[65536]{0}', space=vmem, size = 0x10000, scoped, tag = 'input window, operand 2, single buffered']
    #allocation5 [shape = 's32[1]{0}', space=sflag, size = 0x4, scoped, tag = 'scoped memory for noisy_linear_pallas.1']
    #allocation6 [shape = 's32[1]{0}', space=sflag, size = 0x4, scoped, tag = 'scoped memory for noisy_linear_pallas.1']
    #allocation7 [shape = 'u8[65536]{0}', space=vmem, size = 0x10000, scoped, tag = 'input window, operand 3, single buffered']
    #allocation8 [shape = 's32[1]{0}', space=sflag, size = 0x4, scoped, tag = 'scoped memory for noisy_linear_pallas.1']
    #allocation9 [shape = 'u8[4096]{0}', space=vmem, size = 0x1000, scoped, tag = 'output window, operand 0, single buffered']
    %11 = vsyncpa [#allocation5], 0
    %12 = vsyncpa [#allocation8], 0
    %13 = vsyncpa [#allocation6], 0
    // Predicated region
    $region2: #{noisy_linear_pallas.1} parent=1 // pred_check
      _
    $region3: #{noisy_linear_pallas.1} parent=1 // pred_check_branch
      %15 = sbr.rel (0) target = $region5
    $region4: #{noisy_linear_pallas.1} parent=1 // pred_region
      _
    $region5: #{noisy_linear_pallas.1} parent=1 // pred_fallthru
      _
    // Predicated region
    $region6: #{noisy_linear_pallas.1} parent=1 // pred_check
      _
    $region7: #{noisy_linear_pallas.1} parent=1 // pred_check_branch
      %17 = sbr.rel (0) target = $region9
    $region8: #{noisy_linear_pallas.1} parent=1 // pred_region
      _
    $region9: #{noisy_linear_pallas.1} parent=1 // pred_fallthru
      _
    // Predicated region
    $region10: #{noisy_linear_pallas.1} parent=1 // pred_check
      _
    $region11: #{noisy_linear_pallas.1} parent=1 // pred_check_branch
      %19 = sbr.rel (0) target = $region13
    $region12: #{noisy_linear_pallas.1} parent=1 // pred_region
      %21 = vsyncadd [#allocation5], 0
      %s22 = sshll.u32 %s2, 4
      %s23 = int_to_ptr.hbm [resolvable:$true] %s22
      %s24 = sshll.u32 [#allocation4], 4
      %s25 = int_to_ptr.vmem [resolvable:$true] %s24
      %30 = dma.hbm_to_vmem [thread:$0]  %s23, 2048, %s25, [#allocation5], 128, 128, 8
    $region13: #{noisy_linear_pallas.1} parent=1 // pred_fallthru
      _
    // Predicated region
    $region14: #{noisy_linear_pallas.1} parent=1 // pred_check
      _
    $region15: #{noisy_linear_pallas.1} parent=1 // pred_check_branch
      %32 = sbr.rel (0) target = $region17
    $region16: #{noisy_linear_pallas.1} parent=1 // pred_region
      %34 = vsyncadd [#allocation8], 0
      %s35 = sshll.u32 %s3, 4
      %s36 = int_to_ptr.hbm [resolvable:$true] %s35
      %s37 = sshll.u32 [#allocation7], 4
      %s38 = int_to_ptr.vmem [resolvable:$true] %s37
      %43 = dma.hbm_to_vmem [thread:$0]  %s36, 2048, %s38, [#allocation8], 128, 128, 8
    $region17: #{noisy_linear_pallas.1} parent=1 // pred_fallthru
      _
    // Predicated region
    $region18: #{noisy_linear_pallas.1} parent=1 // pred_check
      _
    $region19: #{noisy_linear_pallas.1} parent=1 // pred_check_branch
      %45 = sbr.rel (0) target = $region21
    $region20: #{noisy_linear_pallas.1} parent=1 // pred_region
      _
    $region21: #{noisy_linear_pallas.1} parent=1 // pred_fallthru
      _
    // Predicated region
    $region22: #{noisy_linear_pallas.1} parent=1 // pred_check
      _
    $region23: #{noisy_linear_pallas.1} parent=1 // pred_check_branch
      %47 = sbr.rel (0) target = $region25
    $region24: #{noisy_linear_pallas.1} parent=1 // pred_region
      _
    $region25: #{noisy_linear_pallas.1} parent=1 // pred_fallthru
      _
    // Predicated region
    $region26: #{noisy_linear_pallas.1} parent=1 // pred_check
      _
    $region27: #{noisy_linear_pallas.1} parent=1 // pred_check_branch
      %49 = sbr.rel (0) target = $region29
    $region28: #{noisy_linear_pallas.1} parent=1 // pred_region
      %51 = dma.done [#allocation5], 2048
    $region29: #{noisy_linear_pallas.1} parent=1 // pred_fallthru
      _
    // Predicated region
    $region30: #{noisy_linear_pallas.1} parent=1 // pred_check
      _
    $region31: #{noisy_linear_pallas.1} parent=1 // pred_check_branch
      %53 = sbr.rel (0) target = $region33
    $region32: #{noisy_linear_pallas.1} parent=1 // pred_region
      %55 = dma.done [#allocation8], 2048
    $region33: #{noisy_linear_pallas.1} parent=1 // pred_fallthru
      _
    %p56 = scmp.eq.s32.totalorder 0, 0
    // Predicated region
    $region34: #{noisy_linear_pallas.1} parent=1 // pred_check
      %p57 = pneg %p56
    $region35: #{noisy_linear_pallas.1} parent=1 // pred_check_branch
      %59 = sbr.rel (%p57) target = $region37
    $region36: #{noisy_linear_pallas.1} parent=1 // pred_region
      %60 = vst [vmem:[#allocation2] sm:$0xff] 0.0
      %61 = vst [vmem:[#allocation3] sm:$0xff] 0.0
    $region37: #{noisy_linear_pallas.1} parent=1 // pred_fallthru
      _
    %v62 = vld [vmem:[#allocation2] sm:$0xff]
    %v63 = vld [vmem:[%s0] sm:$0xff]
    %v64 = vld [vmem:[#allocation4] sm:$0xff]
    %v65 = vld [vmem:[#allocation4 + $0x8] sm:$0xff]
    %v66 = vld [vmem:[#allocation4 + $0x10] sm:$0xff]
    %v67 = vld [vmem:[#allocation4 + $0x18] sm:$0xff]
    %v68 = vld [vmem:[#allocation4 + $0x20] sm:$0xff]
    %v69 = vld [vmem:[#allocation4 + $0x28] sm:$0xff]
    %v70 = vld [vmem:[#allocation4 + $0x30] sm:$0xff]
    %v71 = vld [vmem:[#allocation4 + $0x38] sm:$0xff]
    %v72 = vld [vmem:[#allocation4 + $0x40] sm:$0xff]
    %v73 = vld [vmem:[#allocation4 + $0x48] sm:$0xff]
    %v74 = vld [vmem:[#allocation4 + $0x50] sm:$0xff]
    %v75 = vld [vmem:[#allocation4 + $0x58] sm:$0xff]
    %v76 = vld [vmem:[#allocation4 + $0x60] sm:$0xff]
    %v77 = vld [vmem:[#allocation4 + $0x68] sm:$0xff]
    %v78 = vld [vmem:[#allocation4 + $0x70] sm:$0xff]
    %v79 = vld [vmem:[#allocation4 + $0x78] sm:$0xff]
    %80 = vmatpush.msra.mxu0 %v79
    %81 = vmatpush.msra.mxu0 %v78
    %82 = vmatpush.msra.mxu0 %v77
    %83 = vmatpush.msra.mxu0 %v76
    %84 = vmatpush.msra.mxu0 %v75
    %85 = vmatpush.msra.mxu0 %v74
    %86 = vmatpush.msra.mxu0 %v73
    %87 = vmatpush.msra.mxu0 %v72
    %88 = vmatpush.msra.mxu0 %v71
    %89 = vmatpush.msra.mxu0 %v70
    %90 = vmatpush.msra.mxu0 %v69
    %91 = vmatpush.msra.mxu0 %v68
    %92 = vmatpush.msra.mxu0 %v67
    %93 = vmatpush.msra.mxu0 %v66
    %94 = vmatpush.msra.mxu0 %v65
    %95 = vmatpush.msra.mxu0 %v64
    %96 = vmatmul.f32.gmra.mxu0 %v63
    %v97 = vpop.f32.mrf.mxu0
    %v98 = vadd.f32 0.0, %v97
    %99 = vdwg.mxu0
    %v100 = vadd.f32 %v62, %v98
    %101 = vst [vmem:[#allocation2] sm:$0xff] %v100
    %v102 = vld [vmem:[#allocation3] sm:$0xff]
    %v103 = vld [vmem:[%s1] sm:$0xff]
    %v104 = vld [vmem:[#allocation7] sm:$0xff]
    %v105 = vld [vmem:[#allocation7 + $0x8] sm:$0xff]
    %v106 = vld [vmem:[#allocation7 + $0x10] sm:$0xff]
    %v107 = vld [vmem:[#allocation7 + $0x18] sm:$0xff]
    %v108 = vld [vmem:[#allocation7 + $0x20] sm:$0xff]
    %v109 = vld [vmem:[#allocation7 + $0x28] sm:$0xff]
    %v110 = vld [vmem:[#allocation7 + $0x30] sm:$0xff]
    %v111 = vld [vmem:[#allocation7 + $0x38] sm:$0xff]
    %v112 = vld [vmem:[#allocation7 + $0x40] sm:$0xff]
    %v113 = vld [vmem:[#allocation7 + $0x48] sm:$0xff]
    %v114 = vld [vmem:[#allocation7 + $0x50] sm:$0xff]
    %v115 = vld [vmem:[#allocation7 + $0x58] sm:$0xff]
    %v116 = vld [vmem:[#allocation7 + $0x60] sm:$0xff]
    %v117 = vld [vmem:[#allocation7 + $0x68] sm:$0xff]
    %v118 = vld [vmem:[#allocation7 + $0x70] sm:$0xff]
    %v119 = vld [vmem:[#allocation7 + $0x78] sm:$0xff]
    %120 = vmatpush.msra.mxu0 %v119
    %121 = vmatpush.msra.mxu0 %v118
    %122 = vmatpush.msra.mxu0 %v117
    %123 = vmatpush.msra.mxu0 %v116
    %124 = vmatpush.msra.mxu0 %v115
    %125 = vmatpush.msra.mxu0 %v114
    %126 = vmatpush.msra.mxu0 %v113
    %127 = vmatpush.msra.mxu0 %v112
    %128 = vmatpush.msra.mxu0 %v111
    %129 = vmatpush.msra.mxu0 %v110
    %130 = vmatpush.msra.mxu0 %v109
    %131 = vmatpush.msra.mxu0 %v108
    %132 = vmatpush.msra.mxu0 %v107
    %133 = vmatpush.msra.mxu0 %v106
    %134 = vmatpush.msra.mxu0 %v105
    %135 = vmatpush.msra.mxu0 %v104
    %136 = vmatmul.f32.gmra.mxu0 %v103
    %v137 = vpop.f32.mrf.mxu0
    %v138 = vadd.f32 0.0, %v137
    %139 = vdwg.mxu0
    %v140 = vadd.f32 %v102, %v138
    %141 = vst [vmem:[#allocation3] sm:$0xff] %v140
    // Predicated region
    $region38: #{noisy_linear_pallas.1} parent=1 // pred_check
      %p142 = pneg %p56
    $region39: #{noisy_linear_pallas.1} parent=1 // pred_check_branch
      %144 = sbr.rel (%p142) target = $region41
    $region40: #{noisy_linear_pallas.1} parent=1 // pred_region
      %v145 = vld [vmem:[#allocation2] sm:$0xff]
      %v146 = vld [vmem:[#allocation3] sm:$0xff]
      %v147 = vld [vmem:[%s4] sm:$0x1]
      %v149 = vperm.slane %v147, 0
      %v151 = vmul.f32 %v146, %v149
      %v152 = vadd.f32 %v145, %v151
      %v153 = vld [vmem:[%s5] sm:$0x1]
      %v155 = vperm.slane %v153, 0
      %v157 = vadd.f32 %v152, %v155
      %158 = vst [vmem:[#allocation9] sm:$0xff] %v157
    $region41: #{noisy_linear_pallas.1} parent=1 // pred_fallthru
      _
    // Predicated region
    $region42: #{noisy_linear_pallas.1} parent=1 // pred_check
      _
    $region43: #{noisy_linear_pallas.1} parent=1 // pred_check_branch
      %160 = sbr.rel (0) target = $region45
    $region44: #{noisy_linear_pallas.1} parent=1 // pred_region
      %162 = vsyncadd [#allocation6], 0
      %s164 = sshll.u32 [#allocation9], 4
      %s165 = int_to_ptr.vmem [resolvable:$true] %s164
      %s166 = sshll.u32 %s6, 4
      %s167 = int_to_ptr.hbm [resolvable:$true] %s166
      %169 = dma.vmem_to_hbm [thread:$0]  %s165, 128, %s167, [#allocation6]
    $region45: #{noisy_linear_pallas.1} parent=1 // pred_fallthru
      _
    // Predicated region
    $region46: #{noisy_linear_pallas.1} parent=1 // pred_check
      _
    $region47: #{noisy_linear_pallas.1} parent=1 // pred_check_branch
      %171 = sbr.rel (0) target = $region49
    $region48: #{noisy_linear_pallas.1} parent=1 // pred_region
      %173 = dma.done [#allocation6], 128
    $region49: #{noisy_linear_pallas.1} parent=1 // pred_fallthru
      _
    %174 = vsyncpa [#allocation5], 1
    %175 = vsyncpa [#allocation8], 1
    %176 = vsyncpa [#allocation6], 1

</llo_original>
